<compile_context>
chip_gen: v5e
topology: v5e:2x2
jax: 0.10.0
libtpu: 0.0.40
codegen_flags: <defaults>
</compile_context>

<pallas_src>
import functools

import jax
import jax.numpy as jnp
from jax.experimental import pallas as pl
from jax.experimental.pallas import tpu as pltpu


def _round_up(n, m):
    return n + (-n % m)


# ---------------------------------------------------------------------------
# Pallas kernel: fused global-avg-pool + channel Conv1d + sigmoid + rescale
# ---------------------------------------------------------------------------

def _eca_kernel(band_ref, x_ref, o_ref, *, inv_hw):
    """One batch element per grid step.

    band_ref : (Cp, Cp) f32   banded matrix encoding the k-tap channel Conv1d
    x_ref    : (1, Cp, HWp)   input activations (channels x flattened spatial)
    o_ref    : (1, Cp, HWp)   gated output, same dtype as the input
    """
    xf = x_ref[0].astype(jnp.float32)                              # (Cp, HWp)

    # Global average pool: lane reduction (XLU) + scale.  Spatial zero padding
    # contributes nothing to the sum; inv_hw uses the true H*W.
    mean = jnp.sum(xf, axis=-1, keepdims=True) * inv_hw            # (Cp, 1)

    # Conv1d across channels as a banded matmul.  Replicate the pooled vector
    # across 128 lanes so the MXU gets an aligned (Cp,Cp)@(Cp,128) operand
    # (all result columns are identical); this is still negligible MXU work.
    mean_b = jnp.broadcast_to(mean, (mean.shape[0], 128))          # (Cp, 128)
    y = jnp.dot(band_ref[...], mean_b,
                preferred_element_type=jnp.float32)                # (Cp, 128)

    # Sigmoid gate: exp on the EUP, reciprocal instead of a VPU divide.
    gate = pl.reciprocal(1.0 + jnp.exp(-y[:, :1]), approx=False)   # (Cp, 1)

    # Rescale and write back (lane-broadcast of the gate, lane-dense store).
    o_ref[0] = (xf * gate).astype(o_ref.dtype)


# ---------------------------------------------------------------------------
# Wrapper
# ---------------------------------------------------------------------------

def _conv1d_band_matrix(w, c):
    """(c, c) matrix B with B[co, ci] = w[ci - co + pad], zero outside the band.

    y = B @ m reproduces PyTorch Conv1d(1, 1, k, padding=(k-1)//2, bias=False)
    applied along the channel axis of the pooled vector m (zero padding at the
    channel edges — out-of-range taps simply have no column / hit zero rows).
    """
    k = w.shape[0]
    pad = (k - 1) // 2
    co = jnp.arange(c)[:, None]
    ci = jnp.arange(c)[None, :]
    idx = ci - co + pad
    valid = (idx >= 0) & (idx < k)
    return jnp.where(valid, w[jnp.clip(idx, 0, k - 1)], 0.0).astype(jnp.float32)


def eca_forward(x_nchw, conv_w):
    """eca_layer forward.  x_nchw: (N, C, H, W); conv_w: (k,) Conv1d weight."""
    N, C, H, W = x_nchw.shape
    HW = H * W
    # Alignment targets: channels -> 8-sublane tile (matmul alignment),
    # spatial -> 128-lane tile (unmasked stores).  Padding only if misaligned.
    Cp = _round_up(C, 8)
    HWp = _round_up(HW, 128)
    padded = (Cp, HWp) != (C, HW)

    xr = x_nchw.reshape(N, C, HW)
    if padded:
        xr = jnp.pad(xr, ((0, 0), (0, Cp - C), (0, HWp - HW)))
    band = _conv1d_band_matrix(conv_w.astype(jnp.float32), Cp)

    # One (Cp, HWp) slab per grid step, double-buffered in + out, must fit in
    # VMEM; true for typical ECA placements (modest C x spatial products).
    # TODO(synk): spatially-tiled two-pass variant for slabs that exceed VMEM.
    slab_bytes = Cp * HWp * x_nchw.dtype.itemsize
    vmem_limit = int(min(max(4 * slab_bytes + 2 * Cp * Cp * 4 + (2 << 20),
                             32 << 20),
                         100 << 20))

    out = pl.pallas_call(
        functools.partial(_eca_kernel, inv_hw=1.0 / HW),
        out_shape=jax.ShapeDtypeStruct((N, Cp, HWp), x_nchw.dtype),
        grid_spec=pltpu.PrefetchScalarGridSpec(
            num_scalar_prefetch=0,
            grid=(N,),
            in_specs=[
                pl.BlockSpec((Cp, Cp), lambda n: (0, 0)),
                pl.BlockSpec((1, Cp, HWp), lambda n: (n, 0, 0)),
            ],
            out_specs=pl.BlockSpec((1, Cp, HWp), lambda n: (n, 0, 0)),
        ),
        compiler_params=pltpu.CompilerParams(
            dimension_semantics=("parallel",),
            vmem_limit_bytes=vmem_limit),
    )(band, xr)

    if padded:
        out = out[:, :C, :HW]
    return out.reshape(N, C, H, W)


# ---------------------------------------------------------------------------
# Pure-JAX reference (matches the PyTorch eca_layer forward)
# ---------------------------------------------------------------------------

def eca_reference(x, conv_w):
    N, C, H, W = x.shape
    k = conv_w.shape[0]
    pad = (k - 1) // 2
    m = jnp.mean(x.astype(jnp.float32), axis=(2, 3))             # (N, C)
    mp = jnp.pad(m, ((0, 0), (pad, pad)))
    y = sum(conv_w[j] * mp[:, j:j + C] for j in range(k))        # (N, C)
    gate = jax.nn.sigmoid(y)
    return (x.astype(jnp.float32) * gate[:, :, None, None]).astype(x.dtype)


if __name__ == "__main__":
    N, C, H, W = 2, 4, 16, 16
    k_size = 3

    key = jax.random.PRNGKey(0)
    kx, kw = jax.random.split(key)
    x = jax.random.normal(kx, (N, C, H, W), jnp.float32)
    # Equivalent of PyTorch Conv1d(1, 1, k_size, bias=False).weight[0, 0].
    conv_w = 0.5 * jax.random.normal(kw, (k_size,), jnp.float32)

    fwd = jax.jit(eca_forward)
    out = jax.block_until_ready(fwd(x, conv_w))

    ref = eca_reference(x, conv_w)
    assert out.shape == x.shape, out.shape
    assert bool(jnp.all(jnp.isfinite(out)))
    max_err = float(jnp.max(jnp.abs(out - ref)))
    assert max_err < 1e-3, max_err
    print("KERNEL_OK")
</pallas_src>

<mosaic_0001>
module attributes {stable_mosaic.version = 11 : i64} {
  func.func @_eca_kernel(%arg0: i32, %arg1: memref<8x8xf32, #tpu.memory_space<vmem>>, %arg2: memref<1x8x256xf32, #tpu.memory_space<vmem>>, %arg3: memref<1x8x256xf32, #tpu.memory_space<vmem>>) attributes {dimension_semantics = [#tpu.dimension_semantics<parallel>], iteration_bounds = array<i64: 2>, scalar_prefetch = 0 : i64, scratch_operands = 0 : i64, tpu.core_type = #tpu.core_type<tc>, window_params = [{pipeline_mode = #tpu.pipeline_mode<synchronous>, transform_indices = @transform_0, window_bounds = array<i64: 8, 8>}, {transform_indices = @transform_1, window_bounds = array<i64: 1, 8, 256>}, {transform_indices = @transform_2, window_bounds = array<i64: 1, 8, 256>}]} {
    %c0 = arith.constant 0 : index
    %c0_0 = arith.constant 0 : index
    %c0_1 = arith.constant 0 : index
    %0 = vector.load %arg2[%c0, %c0_0, %c0_1] : memref<1x8x256xf32, #tpu.memory_space<vmem>>, vector<1x8x256xf32>
    %1 = vector.shape_cast %0 : vector<1x8x256xf32> to vector<8x256xf32>
    %cst = arith.constant dense<0.000000e+00> : vector<8xf32>
    %2 = vector.multi_reduction <add>, %1, %cst [1] : vector<8x256xf32> to vector<8xf32>
    %3 = vector.shape_cast %2 : vector<8xf32> to vector<8x1xf32>
    %cst_2 = arith.constant 3.906250e-03 : f32
    %4 = vector.broadcast %cst_2 : f32 to vector<8x1xf32>
    %5 = arith.mulf %3, %4 : vector<8x1xf32>
    %6 = vector.shape_cast %5 : vector<8x1xf32> to vector<8x1xf32>
    %7 = vector.broadcast %6 : vector<8x1xf32> to vector<8x128xf32>
    %c0_3 = arith.constant 0 : index
    %c0_4 = arith.constant 0 : index
    %8 = vector.load %arg1[%c0_3, %c0_4] : memref<8x8xf32, #tpu.memory_space<vmem>>, vector<8x8xf32>
    %cst_5 = arith.constant dense<0.000000e+00> : vector<8x128xf32>
    %9 = tpu.matmul %8, %7, %cst_5 {dimension_numbers = #tpu.dot_dimension_numbers<[1], [0], [0], [1], [0, 0, 1, 1], [], []>} : vector<8x8xf32>, vector<8x128xf32>, vector<8x128xf32> -> vector<8x128xf32>
    %10 = vector.extract_strided_slice %9 {offsets = [0, 0], sizes = [8, 1], strides = [1, 1]} : vector<8x128xf32> to vector<8x1xf32>
    %cst_6 = arith.constant 0.000000e+00 : f32
    %11 = vector.broadcast %cst_6 : f32 to vector<8x1xf32>
    %12 = arith.subf %11, %10 : vector<8x1xf32>
    %13 = math.exp %12 : vector<8x1xf32>
    %cst_7 = arith.constant 1.000000e+00 : f32
    %14 = vector.broadcast %cst_7 : f32 to vector<8x1xf32>
    %15 = arith.addf %14, %13 : vector<8x1xf32>
    %16 = tpu.reciprocal %15 : vector<8x1xf32> -> vector<8x1xf32>
    %17 = vector.broadcast %16 : vector<8x1xf32> to vector<8x256xf32>
    %18 = arith.mulf %1, %17 : vector<8x256xf32>
    %c0_8 = arith.constant 0 : index
    %c0_9 = arith.constant 0 : index
    %c0_10 = arith.constant 0 : index
    %19 = vector.load %arg3[%c0_8, %c0_9, %c0_10] : memref<1x8x256xf32, #tpu.memory_space<vmem>>, vector<1x8x256xf32>
    %20 = vector.shape_cast %19 : vector<1x8x256xf32> to vector<8x256xf32>
    %21 = vector.shape_cast %18 : vector<8x256xf32> to vector<1x8x256xf32>
    tpu.vector_store %arg3[%c0_8, %c0_9, %c0_10], %21 {strides = array<i32>} : memref<1x8x256xf32, #tpu.memory_space<vmem>>, vector<1x8x256xf32>,
    return
  }
  func.func @transform_0(%arg0: i32) -> (i32, i32) {
    %c0_i32 = arith.constant 0 : i32
    %c0_i32_0 = arith.constant 0 : i32
    %c0_i32_1 = arith.constant 0 : i32
    return %c0_i32, %c0_i32_0 : i32, i32
  }
  func.func @transform_1(%arg0: i32) -> (i32, i32, i32) {
    %c0_i32 = arith.constant 0 : i32
    %c0_i32_0 = arith.constant 0 : i32
    %c0_i32_1 = arith.constant 0 : i32
    return %arg0, %c0_i32, %c0_i32_0 : i32, i32, i32
  }
  func.func @transform_2(%arg0: i32) -> (i32, i32, i32) {
    %c0_i32 = arith.constant 0 : i32
    %c0_i32_0 = arith.constant 0 : i32
    %c0_i32_1 = arith.constant 0 : i32
    return %arg0, %c0_i32, %c0_i32_0 : i32, i32, i32
  }
}

</mosaic_0001>

<llo_original>
// kernel: eca_forward.1
$region0: #{eca_forward.1}
  #allocation0 [shape = 'u32[]', space=smem, size = 0x4, offset = 0x4, fixed_abs, tag = 'smem constant byte address 0x4 - core index']
  #allocation1 [shape = 'u32[72,128]{1,0:T(1,128)}', space=vmem, size = 0x9000, scoped, tag = 'internal scratch']
  %s0 = inlined_call_operand.vmem [shape: f32[8,8], index: 0, kind: input, shape index: {}]
  %s1 = inlined_call_operand.vmem [shape: f32[2,8,256], index: 1, kind: input, shape index: {}]
  %s2 = inlined_call_operand.vmem [shape: f32[2,8,256], index: 2, kind: output, shape index: {}]
  %s3 = sld [smem:[#allocation0]]
  $region41: #{eca_forward.1} parent=0
    _
  %s5 = ssub.s32 1, %s3
  %s6 = scalar_select 0, %s5, %s3
  loop: start=0, step=1, limit=4
  $region2: #{eca_forward.1} parent=0 // loop_pre_header
    _
  $region3: #{eca_forward.1} parent=0 // loop_header
    %s8 = sphi 0, %s12
    %p9 = scmp.ge.s32.totalorder %s8, 4
    %s16 = sphi 0, %s16
    %s18 = sphi 0, %s16
    %s19 = sphi 0, %s18
    %s33 = sphi 0, %s19
    %s39 = sphi 0, %s41
    %s42 = sphi 0, %s39
    %s43 = sphi 0, %s42
    %s59 = sphi 0, %s43
    %s65 = sphi 0, %s67
    %s68 = sphi 0, %s65
    %s69 = sphi 0, %s68
    %s85 = sphi 0, %s69
  $region4: #{eca_forward.1} parent=0 // loop_header_branch
    %11 = sbr.rel (%p9) target = $region8
  $region5: #{eca_forward.1} parent=0 // loop_body
    %s13 = ssub.s32 %s8, 1
    %s14 = ssub.s32 %s8, 2
    %s15 = sadd.s32 %s8, 1
    %s17 = sadd.s32 %s16, 1
    %p20 = scmp.eq.s32.totalorder %s8, 1
    %p21 = scmp.ne.s32.totalorder %s16, %s18
    %p22 = scmp.eq.s32.totalorder %s8, 0
    %p23 = por %p21, %p22
    %p24 = scmp.ne.s32.totalorder %s16, %s18
    %p25 = scmp.eq.s32.totalorder %s13, 1
    %p26 = por %p24, %p25
    %p27 = scmp.ne.s32.totalorder %s18, %s19
    %p28 = scmp.eq.s32.totalorder %s13, 0
    %p29 = por %p27, %p28
    %p30 = scmp.ne.s32.totalorder %s18, %s19
    %p31 = scmp.eq.s32.totalorder %s14, 1
    %p32 = por %p30, %p31
    %p34 = scmp.ne.s32.totalorder %s19, %s33
    %p35 = scmp.eq.s32.totalorder %s14, 0
    %p36 = por %p34, %p35
    %s37 = ssub.s32 %s8, %s15
    %p38 = scmp.eq.s32.totalorder %s37, 0
    %s40 = sadd.s32 %s39, 1
    %s41 = scalar_select %p38, %s39, %s40
    %p44 = pneg %p38
    %p45 = scmp.eq.s32.totalorder %s8, 1
    %p46 = por %p44, %p45
    %p47 = scmp.ne.s32.totalorder %s39, %s42
    %p48 = scmp.eq.s32.totalorder %s8, 0
    %p49 = por %p47, %p48
    %p50 = scmp.ne.s32.totalorder %s39, %s42
    %p51 = scmp.eq.s32.totalorder %s13, 1
    %p52 = por %p50, %p51
    %p53 = scmp.ne.s32.totalorder %s42, %s43
    %p54 = scmp.eq.s32.totalorder %s13, 0
    %p55 = por %p53, %p54
    %p56 = scmp.ne.s32.totalorder %s42, %s43
    %p57 = scmp.eq.s32.totalorder %s14, 1
    %p58 = por %p56, %p57
    %p60 = scmp.ne.s32.totalorder %s43, %s59
    %p61 = scmp.eq.s32.totalorder %s14, 0
    %p62 = por %p60, %p61
    %s63 = ssub.s32 %s8, %s15
    %p64 = scmp.eq.s32.totalorder %s63, 0
    %s66 = sadd.s32 %s65, 1
    %s67 = scalar_select %p64, %s65, %s66
    %p70 = pneg %p64
    %p71 = scmp.eq.s32.totalorder %s8, 1
    %p72 = por %p70, %p71
    %p73 = scmp.ne.s32.totalorder %s65, %s68
    %p74 = scmp.eq.s32.totalorder %s8, 0
    %p75 = por %p73, %p74
    %p76 = scmp.ne.s32.totalorder %s65, %s68
    %p77 = scmp.eq.s32.totalorder %s13, 1
    %p78 = por %p76, %p77
    %p79 = scmp.ne.s32.totalorder %s68, %s69
    %p80 = scmp.eq.s32.totalorder %s13, 0
    %p81 = por %p79, %p80
    %p82 = scmp.ne.s32.totalorder %s68, %s69
    %p83 = scmp.eq.s32.totalorder %s14, 1
    %p84 = por %p82, %p83
    %p86 = scmp.ne.s32.totalorder %s69, %s85
    %p87 = scmp.eq.s32.totalorder %s14, 0
    %p88 = por %p86, %p87
    %p89 = scmp.le.s32.totalorder 1, %s8
    %p90 = scmp.lt.s32.totalorder %s8, 3
    %p91 = pnand %p89, %p90
    %p92 = pneg %p91
    // Predicated region
    $region9: #{eca_forward.1} parent=5 // pred_check
      _
    $region10: #{eca_forward.1} parent=5 // pred_check_branch
      %94 = sbr.rel (%p91) target = $region12
    $region11: #{eca_forward.1} parent=5 // pred_region
      %s95 = ssub.s32 %s8, 1
      // Predicated region
      $region13: #{eca_forward.1} parent=11 // pred_check
        %p96 = pneg %p29
      $region14: #{eca_forward.1} parent=11 // pred_check_branch
        %98 = sbr.rel (%p96) target = $region16
      $region15: #{eca_forward.1} parent=11 // pred_region
        _
      $region16: #{eca_forward.1} parent=11 // pred_fallthru
        _
    $region12: #{eca_forward.1} parent=5 // pred_fallthru
      _
    %p99 = scmp.lt.s32.totalorder %s8, 2
    // Predicated region
    $region17: #{eca_forward.1} parent=5 // pred_check
      %p100 = pneg %p99
    $region18: #{eca_forward.1} parent=5 // pred_check_branch
      %102 = sbr.rel (%p100) target = $region20
    $region19: #{eca_forward.1} parent=5 // pred_region
      // Predicated region
      $region21: #{eca_forward.1} parent=19 // pred_check
        %p103 = pneg %p49
      $region22: #{eca_forward.1} parent=19 // pred_check_branch
        %105 = sbr.rel (%p103) target = $region24
      $region23: #{eca_forward.1} parent=19 // pred_region
        %p106 = scmp.lt.s32.totalorder %s8, 1
        %s107 = scalar_select %p106, %s8, 1
        %s108 = smul.addr %s107, 2
        %s109 = smul.addr %s108, 8
        %s110 = scalar_lea.vmem %s1, %s109
      $region24: #{eca_forward.1} parent=19 // pred_fallthru
        _
    $region20: #{eca_forward.1} parent=5 // pred_fallthru
      _
    %p111 = scmp.le.s32.totalorder 1, %s8
    %p112 = scmp.lt.s32.totalorder %s8, 3
    %p113 = pnand %p111, %p112
    %p114 = pneg %p113
    // Predicated region
    $region25: #{eca_forward.1} parent=5 // pred_check
      _
    $region26: #{eca_forward.1} parent=5 // pred_check_branch
      %116 = sbr.rel (%p113) target = $region28
    $region27: #{eca_forward.1} parent=5 // pred_region
      %s117 = ssub.s32 %s8, 1
      %p118 = pneg %p29
      %p119 = pneg %p26
      %p120 = scmp.lt.s32.totalorder %s13, 1
      %s121 = scalar_select %p120, %s13, 1
      %s122 = smul.addr %s121, 2
      %s123 = smul.addr %s122, 8
      %s124 = scalar_lea.vmem %s1, %s123
      %p125 = pneg %p55
      %p126 = pneg %p52
      %p127 = pneg %p81
      %p128 = pneg %p78
      %p129 = scmp.lt.s32.totalorder %s13, 1
      %s130 = scalar_select %p129, %s13, 1
      %s131 = smul.addr %s130, 2
      %s132 = smul.addr %s131, 8
      %s133 = scalar_lea.vmem %s2, %s132
      %p134 = scmp.lt.s32.totalorder %s13, 1
      %s135 = scalar_select %p134, %s13, 1
      %s136 = smul.addr %s135, 2
      %s137 = smul.addr %s136, 8
      %s138 = scalar_lea.vmem %s1, %s137
      %p139 = scmp.lt.s32.totalorder %s13, 1
      %s140 = scalar_select %p139, %s13, 1
      %s141 = smul.addr %s140, 2
      %s142 = smul.addr %s141, 8
      %s143 = scalar_lea.vmem %s2, %s142
      %v144 = vld [vmem:[%s138] sm:$0xff]
      %v145 = vld [vmem:[%s138 + $0x8] sm:$0xff]
      %v146 = vadd.f32 %v144, %v145
      %147 = vadd.xlane.f32.xlu0 %v146
      %v148 = vpop.xlane.xlu0 %147
      %v149 = vmul.f32 %v148, 0.00390625
      %v150 = vld [vmem:[%s0] sm:$0xff]
      %vm151 = vcmask 64512
      %v153 = vsel %vm151, %v150, 0
      %155 = vmatpush.msra.mxu0 0.0
      %156 = vmatpush.msra.mxu0 0.0
      %157 = vmatpush.msra.mxu0 0.0
      %158 = vmatpush.msra.mxu0 0.0
      %159 = vmatpush.msra.mxu0 0.0
      %160 = vmatpush.msra.mxu0 0.0
      %161 = vmatpush.msra.mxu0 0.0
      %162 = vmatpush.msra.mxu0 0.0
      %163 = vmatpush.msra.mxu0 0.0
      %164 = vmatpush.msra.mxu0 0.0
      %165 = vmatpush.msra.mxu0 0.0
      %166 = vmatpush.msra.mxu0 0.0
      %167 = vmatpush.msra.mxu0 0.0
      %168 = vmatpush.msra.mxu0 0.0
      %169 = vmatpush.msra.mxu0 0.0
      %170 = vmatpush.msra.mxu0 %v149
      %171 = vmatmul.f32.gmra.mxu0 %v153
      %v172 = vpop.f32.mrf.mxu0
      %v173 = vadd.f32 0.0, %v172
      %174 = vdwg.mxu0
      %v175 = vsub.f32 0.0, %v173
      %v176 = vmul.f32 %v175, 1.442695
      %v177 = vpow.pop %v176
      %v178 = vadd.f32 %v177, 1.0
      %v179 = vrcp.pop %v178
      %v180 = vmul.f32 %v178, %v179
      %v181 = vsub.f32 1.0, %v180
      %v182 = vmul.f32 %v179, %v181
      %v183 = vadd.f32 %v179, %v182
      %vm184 = vweird.f32 %v178
      %vm185 = vweird.f32 %v179
      %vm186 = vmor %vm184, %vm185
      %v187 = vsel %vm186, %v179, %v183
      %v188 = vand.u32 2147483647, %v178
      %vm189 = vcmp.eq.f32.partialorder %v188, 8.507059e+37
      %v190 = vand.u32 %v178, 2147483648
      %v191 = vor.u32 1.1754944e-38, %v190
      %v192 = vsel %vm189, %v191, %v187
      %194 = vset.pattern.permute.xlu0 0
      %195 = vperm.xlu0 %194, %v192
      %v196 = vpop.permute.xlu0 %195
      %v198 = vmul.f32 %v144, %v196
      %v199 = vmul.f32 %v145, %v196
      %200 = vst [vmem:[%s143] sm:$0xff] %v198
      %201 = vst [vmem:[%s143 + $0x8] sm:$0xff] %v199
      %p202 = scmp.lt.s32.totalorder %s13, 1
      %s203 = scalar_select %p202, %s13, 1
      %s204 = smul.addr %s203, 2
      %s205 = smul.addr %s204, 8
      %s206 = scalar_lea.vmem %s2, %s205
      // Predicated region
      $region29: #{eca_forward.1} parent=27 // pred_check
        %p207 = pneg %p78
      $region30: #{eca_forward.1} parent=27 // pred_check_branch
        %209 = sbr.rel (%p207) target = $region32
      $region31: #{eca_forward.1} parent=27 // pred_region
        _
      $region32: #{eca_forward.1} parent=27 // pred_fallthru
        _
    $region28: #{eca_forward.1} parent=5 // pred_fallthru
      _
    %p210 = scmp.le.s32.totalorder 2, %s8
    // Predicated region
    $region33: #{eca_forward.1} parent=5 // pred_check
      %p211 = pneg %p210
    $region34: #{eca_forward.1} parent=5 // pred_check_branch
      %213 = sbr.rel (%p211) target = $region36
    $region35: #{eca_forward.1} parent=5 // pred_region
      %s214 = ssub.s32 %s8, 2
      // Predicated region
      $region37: #{eca_forward.1} parent=35 // pred_check
        %p215 = pneg %p84
      $region38: #{eca_forward.1} parent=35 // pred_check_branch
        %217 = sbr.rel (%p215) target = $region40
      $region39: #{eca_forward.1} parent=35 // pred_region
        %p218 = scmp.lt.s32.totalorder %s14, 1
        %s219 = scalar_select %p218, %s14, 1
        %s220 = smul.addr %s219, 2
        %s221 = smul.addr %s220, 8
        %s222 = scalar_lea.vmem %s2, %s221
      $region40: #{eca_forward.1} parent=35 // pred_fallthru
        _
    $region36: #{eca_forward.1} parent=5 // pred_fallthru
      _
  $region6: #{eca_forward.1} parent=0 // loop_footer
    %s12 = sadd.s32 1, %s8
  $region7: #{eca_forward.1} parent=0 // loop_footer_branch
    %7 = sbr.rel target = $region3
  $region8: #{eca_forward.1} parent=0 // loop_exit
    _

</llo_original>
